<compile_context>
chip_gen: v7x
topology: tpu7x:2x2x1
jax: 0.10.0
libtpu: 0.0.40
codegen_flags: <defaults>
</compile_context>

<pallas_src>
import functools
import inspect

import jax
import jax.numpy as jnp
from jax.experimental import pallas as pl
from jax.experimental.pallas import tpu as pltpu

_LANE = 128  # lane-dense output width (out_proj padded to this many cols)


def _round_up(v, m):
    return ((v + m - 1) // m) * m


# ----------------------------------------------------------------------------
# Kernel
# ----------------------------------------------------------------------------
def _head_kernel(
    x_ptm_ref,        # (tile_b, H)     activations (native dtype; cast in-kernel)
    x_metric_ref,     # (tile_b, M)
    w_mlp_ref,        # (M, MH)         bf16
    b_mlp_ref,        # (1, MH)         f32
    w_dense_ptm_ref,  # (H, H)          bf16  dense-weight rows multiplying x_ptm
    w_dense_mlp_ref,  # (MH, H)         bf16  dense-weight rows multiplying x_mlp
    b_dense_ref,      # (1, H)          f32
    w_out_ref,        # (H, _LANE)      bf16  zero-padded to lane-dense 128 cols
    b_out_ref,        # (1, _LANE)      f32
    logits_ref,       # (tile_b, _LANE) f32
    *,
    tanh_dtype,
):
    # x_mlp = tanh(mlp(metrics)) -- bf16 MXU operands, f32 accumulation.
    x_met = x_metric_ref[...].astype(jnp.bfloat16)
    pre_mlp = (
        jnp.dot(x_met, w_mlp_ref[...], preferred_element_type=jnp.float32)
        + b_mlp_ref[...]
    )
    x_mlp = jnp.tanh(pre_mlp.astype(tanh_dtype))

    # x = tanh(dense(concat(x_ptm, x_mlp))): the concat is realized as the
    # mathematically identical split matmul over the two pre-split halves of
    # the dense weight (split done once at weight-prep time, tile-aligned).
    x_ptm = x_ptm_ref[...].astype(jnp.bfloat16)
    pre_dense = (
        jnp.dot(x_ptm, w_dense_ptm_ref[...], preferred_element_type=jnp.float32)
        + jnp.dot(x_mlp.astype(jnp.bfloat16), w_dense_mlp_ref[...],
                  preferred_element_type=jnp.float32)
        + b_dense_ref[...]
    )
    x = jnp.tanh(pre_dense.astype(tanh_dtype))

    # logits = out_proj(x) -- full-lane 128-wide store; real C sliced outside.
    logits_ref[...] = (
        jnp.dot(x.astype(jnp.bfloat16), w_out_ref[...],
                preferred_element_type=jnp.float32)
        + b_out_ref[...]
    )


# ----------------------------------------------------------------------------
# Helpers
# ----------------------------------------------------------------------------
_HAS_BUFFERED = hasattr(pl, "Buffered") and (
    "pipeline_mode" in inspect.signature(pl.BlockSpec.__init__).parameters
)


def _resident_spec(shape):
    """BlockSpec for a grid-invariant operand (weights/biases): constant
    index_map; single-buffered when the API supports it (there is no point in
    double-buffering an operand whose block never changes)."""
    nd = len(shape)
    index_map = lambda i: (0,) * nd
    if _HAS_BUFFERED:
        return pl.BlockSpec(shape, index_map, pipeline_mode=pl.Buffered(1))
    return pl.BlockSpec(shape, index_map)


def _default_tanh_dtype():
    """bf16 tanh on v6e/v7x (bf16 EUP); f32 on v5e and older (no bf16 EUP)."""
    try:
        kind = jax.devices()[0].device_kind.lower()
    except Exception:  # pragma: no cover - defensive
        return jnp.float32
    if any(g in kind for g in ("v2", "v3", "v4", "v5")):
        return jnp.float32
    return jnp.bfloat16


def prepare_params(params):
    """One-time weight preprocessing (hoisted out of the per-call path):
    bf16 casts, split of w_dense at the concat boundary, lane-dense padding of
    the out_proj weight/bias, and bias reshapes."""
    H = params["w_dense"].shape[1]
    MH = params["w_mlp"].shape[1]
    C = params["w_out"].shape[1]
    w_dense = params["w_dense"]
    return {
        "w_mlp": params["w_mlp"].astype(jnp.bfloat16),                      # (M, MH)
        "b_mlp": params["b_mlp"].astype(jnp.float32).reshape(1, MH),        # (1, MH)
        "w_dense_ptm": w_dense[:H, :].astype(jnp.bfloat16),                 # (H, H)
        "w_dense_mlp": w_dense[H:, :].astype(jnp.bfloat16),                 # (MH, H)
        "b_dense": params["b_dense"].astype(jnp.float32).reshape(1, H),     # (1, H)
        "w_out": jnp.zeros((H, _LANE), jnp.bfloat16).at[:, :C].set(
            params["w_out"].astype(jnp.bfloat16)),                          # (H, 128)
        "b_out": jnp.zeros((1, _LANE), jnp.float32).at[:, :C].set(
            params["b_out"].astype(jnp.float32)),                           # (1, 128)
        "n_class": int(C),
    }


# ----------------------------------------------------------------------------
# Wrapper
# ----------------------------------------------------------------------------
def commit_metric_classifier_head(x_ptm, mlp_inputs, prep, *, tile_b=512,
                                  tanh_dtype=None):
    """Forward pass of CommitMetricClassifier (post-PTM head), labels=None.

    `prep` is the output of prepare_params() (weights already bf16 / padded).
    Activations are passed through untouched and cast to bf16 in-kernel.
    """
    B, H = x_ptm.shape
    _, M = mlp_inputs.shape
    MH = prep["w_mlp"].shape[1]
    C = prep["n_class"]

    if tanh_dtype is None:
        tanh_dtype = _default_tanh_dtype()

    # Batch tile: multiple of 16 (bf16 sublane pack), no larger than needed.
    tile_b = max(16, min(_round_up(int(tile_b), 16), _round_up(B, 16)))
    grid_n = pl.cdiv(B, tile_b)
    # v7x: make sure both TensorCores get work when the batch is big enough.
    if grid_n == 1 and B >= 32:
        tile_b = _round_up(-(-B // 2), 16)
        grid_n = pl.cdiv(B, tile_b)
    grid = (grid_n,)

    # Explicit VMEM budget derived from the actual buffer sizes (2x headroom
    # also covers the double-buffered-weights fallback when Buffered(1) is
    # unavailable); floor at the 32 MiB scoped default, cap below v7x physical.
    act_itemsize = jnp.dtype(x_ptm.dtype).itemsize
    vmem_needed = (
        2 * tile_b * (H + M) * act_itemsize            # double-buffered activation tiles
        + 2 * tile_b * _LANE * 4                        # double-buffered f32 output tile
        + (M * MH + H * H + MH * H + H * _LANE) * 2     # resident bf16 weights
        + (MH + H + _LANE) * 4                          # f32 biases
    )
    vmem_limit_bytes = int(min(max(2 * vmem_needed + (4 << 20), 32 << 20), 60 << 20))

    flops = 2 * B * (M * MH + (H + MH) * H + H * _LANE)
    bytes_accessed = (
        B * (H + M) * act_itemsize
        + (M * MH + H * H + MH * H + H * _LANE) * 2
        + (MH + H + _LANE) * 4
        + B * _LANE * 4
    )

    kernel = functools.partial(_head_kernel, tanh_dtype=tanh_dtype)

    logits_pad = pl.pallas_call(
        kernel,
        out_shape=jax.ShapeDtypeStruct((B, _LANE), jnp.float32),
        grid_spec=pltpu.PrefetchScalarGridSpec(
            num_scalar_prefetch=0,
            grid=grid,
            in_specs=[
                pl.BlockSpec((tile_b, H), lambda i: (i, 0)),   # x_ptm tile
                pl.BlockSpec((tile_b, M), lambda i: (i, 0)),   # metric tile
                _resident_spec((M, MH)),                       # w_mlp
                _resident_spec((1, MH)),                       # b_mlp
                _resident_spec((H, H)),                        # w_dense (ptm rows)
                _resident_spec((MH, H)),                       # w_dense (mlp rows)
                _resident_spec((1, H)),                        # b_dense
                _resident_spec((H, _LANE)),                    # w_out (padded)
                _resident_spec((1, _LANE)),                    # b_out (padded)
            ],
            out_specs=pl.BlockSpec((tile_b, _LANE), lambda i: (i, 0)),
        ),
        compiler_params=pltpu.CompilerParams(
            dimension_semantics=("parallel",),   # shards batch over v7x's 2 TCs
            vmem_limit_bytes=vmem_limit_bytes,
        ),
        cost_estimate=pl.CostEstimate(
            flops=flops,
            transcendentals=B * (MH + H),
            bytes_accessed=bytes_accessed,
        ),
    )(
        x_ptm, mlp_inputs,
        prep["w_mlp"], prep["b_mlp"],
        prep["w_dense_ptm"], prep["w_dense_mlp"], prep["b_dense"],
        prep["w_out"], prep["b_out"],
    )

    return logits_pad[:, :C]


# ----------------------------------------------------------------------------
# Reference + test harness
# ----------------------------------------------------------------------------
def init_params(key, n_metric, mlp_hidden, ptm_hidden, n_class):
    """Deterministic parameter init; weights stored as (in, out)."""
    ks = jax.random.split(key, 6)
    scale = 0.05
    return {
        "w_mlp":   scale * jax.random.normal(ks[0], (n_metric, mlp_hidden), jnp.float32),
        "b_mlp":   scale * jax.random.normal(ks[1], (mlp_hidden,), jnp.float32),
        "w_dense": scale * jax.random.normal(ks[2], (ptm_hidden + mlp_hidden, ptm_hidden), jnp.float32),
        "b_dense": scale * jax.random.normal(ks[3], (ptm_hidden,), jnp.float32),
        "w_out":   scale * jax.random.normal(ks[4], (ptm_hidden, n_class), jnp.float32),
        "b_out":   scale * jax.random.normal(ks[5], (n_class,), jnp.float32),
    }


def reference_forward(x_ptm, mlp_inputs, params):
    """Pure-JAX f32 reference mirroring the PyTorch forward (dropout = identity)."""
    x_mlp = jnp.tanh(mlp_inputs @ params["w_mlp"] + params["b_mlp"])
    x = jnp.concatenate([x_ptm, x_mlp], axis=1)
    x = jnp.tanh(x @ params["w_dense"] + params["b_dense"])
    return x @ params["w_out"] + params["b_out"]


if __name__ == "__main__":
    key = jax.random.PRNGKey(0)
    k_ptm, k_metric, k_params = jax.random.split(key, 3)

    batch = 2
    n_metric = 4        # number of commit metrics
    mlp_hidden = 16
    ptm_hidden = 32     # small stand-in for the PTM hidden size
    n_class = 2

    x_ptm = jax.random.normal(k_ptm, (batch, ptm_hidden), jnp.float32)
    mlp_inputs = jax.random.normal(k_metric, (batch, n_metric), jnp.float32)
    params = init_params(k_params, n_metric, mlp_hidden, ptm_hidden, n_class)

    prep = prepare_params(params)   # one-time weight prep (out of the call path)

    logits = commit_metric_classifier_head(x_ptm, mlp_inputs, prep)
    jax.block_until_ready(logits)

    ref = reference_forward(x_ptm, mlp_inputs, params)
    assert logits.shape == (batch, n_class), logits.shape
    # bf16 MXU operands (and bf16 tanh on v6e/v7x) -> ~1e-2 tolerance vs f32 ref.
    assert jnp.allclose(logits, ref, atol=2e-2, rtol=2e-2), (logits, ref)

    print("KERNEL_OK")
</pallas_src>

<mosaic_0001>
module attributes {stable_mosaic.version = 11 : i64} {
  func.func @_head_kernel(%arg0: i32, %arg1: memref<16x32xf32, #tpu.memory_space<vmem>>, %arg2: memref<16x4xf32, #tpu.memory_space<vmem>>, %arg3: memref<4x16xbf16, #tpu.memory_space<vmem>>, %arg4: memref<1x16xf32, #tpu.memory_space<vmem>>, %arg5: memref<32x32xbf16, #tpu.memory_space<vmem>>, %arg6: memref<16x32xbf16, #tpu.memory_space<vmem>>, %arg7: memref<1x32xf32, #tpu.memory_space<vmem>>, %arg8: memref<32x128xbf16, #tpu.memory_space<vmem>>, %arg9: memref<1x128xf32, #tpu.memory_space<vmem>>, %arg10: memref<16x128xf32, #tpu.memory_space<vmem>>) attributes {dimension_semantics = [#tpu.dimension_semantics<parallel>], iteration_bounds = array<i64: 1>, scalar_prefetch = 0 : i64, scratch_operands = 0 : i64, tpu.core_type = #tpu.core_type<tc>, window_params = [{transform_indices = @transform_0, window_bounds = array<i64: 16, 32>}, {transform_indices = @transform_1, window_bounds = array<i64: 16, 4>}, {pipeline_mode = #tpu.pipeline_mode<synchronous>, transform_indices = @transform_2, window_bounds = array<i64: 4, 16>}, {pipeline_mode = #tpu.pipeline_mode<synchronous>, transform_indices = @transform_3, window_bounds = array<i64: 1, 16>}, {pipeline_mode = #tpu.pipeline_mode<synchronous>, transform_indices = @transform_4, window_bounds = array<i64: 32, 32>}, {pipeline_mode = #tpu.pipeline_mode<synchronous>, transform_indices = @transform_5, window_bounds = array<i64: 16, 32>}, {pipeline_mode = #tpu.pipeline_mode<synchronous>, transform_indices = @transform_6, window_bounds = array<i64: 1, 32>}, {pipeline_mode = #tpu.pipeline_mode<synchronous>, transform_indices = @transform_7, window_bounds = array<i64: 32, 128>}, {pipeline_mode = #tpu.pipeline_mode<synchronous>, transform_indices = @transform_8, window_bounds = array<i64: 1, 128>}, {transform_indices = @transform_9, window_bounds = array<i64: 16, 128>}]} {
    %c0 = arith.constant 0 : index
    %c0_0 = arith.constant 0 : index
    %0 = vector.load %arg2[%c0, %c0_0] : memref<16x4xf32, #tpu.memory_space<vmem>>, vector<16x4xf32>
    %1 = arith.truncf %0 : vector<16x4xf32> to vector<16x4xbf16>
    %c0_1 = arith.constant 0 : index
    %c0_2 = arith.constant 0 : index
    %2 = vector.load %arg3[%c0_1, %c0_2] : memref<4x16xbf16, #tpu.memory_space<vmem>>, vector<4x16xbf16>
    %cst = arith.constant dense<0.000000e+00> : vector<16x16xf32>
    %3 = tpu.matmul %1, %2, %cst {dimension_numbers = #tpu.dot_dimension_numbers<[1], [0], [0], [1], [0, 0, 1, 1], [], []>} : vector<16x4xbf16>, vector<4x16xbf16>, vector<16x16xf32> -> vector<16x16xf32>
    %c0_3 = arith.constant 0 : index
    %c0_4 = arith.constant 0 : index
    %4 = vector.load %arg4[%c0_3, %c0_4] : memref<1x16xf32, #tpu.memory_space<vmem>>, vector<1x16xf32>
    %5 = vector.broadcast %4 : vector<1x16xf32> to vector<16x16xf32>
    %6 = arith.addf %3, %5 : vector<16x16xf32>
    %7 = arith.truncf %6 : vector<16x16xf32> to vector<16x16xbf16>
    %8 = math.tanh %7 : vector<16x16xbf16>
    %c0_5 = arith.constant 0 : index
    %c0_6 = arith.constant 0 : index
    %9 = vector.load %arg1[%c0_5, %c0_6] : memref<16x32xf32, #tpu.memory_space<vmem>>, vector<16x32xf32>
    %10 = arith.truncf %9 : vector<16x32xf32> to vector<16x32xbf16>
    %c0_7 = arith.constant 0 : index
    %c0_8 = arith.constant 0 : index
    %11 = vector.load %arg5[%c0_7, %c0_8] : memref<32x32xbf16, #tpu.memory_space<vmem>>, vector<32x32xbf16>
    %cst_9 = arith.constant dense<0.000000e+00> : vector<16x32xf32>
    %12 = tpu.matmul %10, %11, %cst_9 {dimension_numbers = #tpu.dot_dimension_numbers<[1], [0], [0], [1], [0, 0, 1, 1], [], []>} : vector<16x32xbf16>, vector<32x32xbf16>, vector<16x32xf32> -> vector<16x32xf32>
    %c0_10 = arith.constant 0 : index
    %c0_11 = arith.constant 0 : index
    %13 = vector.load %arg6[%c0_10, %c0_11] : memref<16x32xbf16, #tpu.memory_space<vmem>>, vector<16x32xbf16>
    %cst_12 = arith.constant dense<0.000000e+00> : vector<16x32xf32>
    %14 = tpu.matmul %8, %13, %cst_12 {dimension_numbers = #tpu.dot_dimension_numbers<[1], [0], [0], [1], [0, 0, 1, 1], [], []>} : vector<16x16xbf16>, vector<16x32xbf16>, vector<16x32xf32> -> vector<16x32xf32>
    %15 = arith.addf %12, %14 : vector<16x32xf32>
    %c0_13 = arith.constant 0 : index
    %c0_14 = arith.constant 0 : index
    %16 = vector.load %arg7[%c0_13, %c0_14] : memref<1x32xf32, #tpu.memory_space<vmem>>, vector<1x32xf32>
    %17 = vector.broadcast %16 : vector<1x32xf32> to vector<16x32xf32>
    %18 = arith.addf %15, %17 : vector<16x32xf32>
    %19 = arith.truncf %18 : vector<16x32xf32> to vector<16x32xbf16>
    %20 = math.tanh %19 : vector<16x32xbf16>
    %c0_15 = arith.constant 0 : index
    %c0_16 = arith.constant 0 : index
    %21 = vector.load %arg8[%c0_15, %c0_16] : memref<32x128xbf16, #tpu.memory_space<vmem>>, vector<32x128xbf16>
    %cst_17 = arith.constant dense<0.000000e+00> : vector<16x128xf32>
    %22 = tpu.matmul %20, %21, %cst_17 {dimension_numbers = #tpu.dot_dimension_numbers<[1], [0], [0], [1], [0, 0, 1, 1], [], []>} : vector<16x32xbf16>, vector<32x128xbf16>, vector<16x128xf32> -> vector<16x128xf32>
    %c0_18 = arith.constant 0 : index
    %c0_19 = arith.constant 0 : index
    %23 = vector.load %arg9[%c0_18, %c0_19] : memref<1x128xf32, #tpu.memory_space<vmem>>, vector<1x128xf32>
    %24 = vector.broadcast %23 : vector<1x128xf32> to vector<16x128xf32>
    %25 = arith.addf %22, %24 : vector<16x128xf32>
    %c0_20 = arith.constant 0 : index
    %c0_21 = arith.constant 0 : index
    %26 = vector.load %arg10[%c0_20, %c0_21] : memref<16x128xf32, #tpu.memory_space<vmem>>, vector<16x128xf32>
    tpu.vector_store %arg10[%c0_20, %c0_21], %25 {strides = array<i32>} : memref<16x128xf32, #tpu.memory_space<vmem>>, vector<16x128xf32>,
    return
  }
  func.func @transform_0(%arg0: i32) -> (i32, i32) {
    %c0_i32 = arith.constant 0 : i32
    %c0_i32_0 = arith.constant 0 : i32
    return %arg0, %c0_i32 : i32, i32
  }
  func.func @transform_1(%arg0: i32) -> (i32, i32) {
    %c0_i32 = arith.constant 0 : i32
    %c0_i32_0 = arith.constant 0 : i32
    return %arg0, %c0_i32 : i32, i32
  }
  func.func @transform_2(%arg0: i32) -> (i32, i32) {
    %c0_i32 = arith.constant 0 : i32
    %c0_i32_0 = arith.constant 0 : i32
    %c0_i32_1 = arith.constant 0 : i32
    return %c0_i32, %c0_i32_0 : i32, i32
  }
  func.func @transform_3(%arg0: i32) -> (i32, i32) {
    %c0_i32 = arith.constant 0 : i32
    %c0_i32_0 = arith.constant 0 : i32
    %c0_i32_1 = arith.constant 0 : i32
    return %c0_i32, %c0_i32_0 : i32, i32
  }
  func.func @transform_4(%arg0: i32) -> (i32, i32) {
    %c0_i32 = arith.constant 0 : i32
    %c0_i32_0 = arith.constant 0 : i32
    %c0_i32_1 = arith.constant 0 : i32
    return %c0_i32, %c0_i32_0 : i32, i32
  }
  func.func @transform_5(%arg0: i32) -> (i32, i32) {
    %c0_i32 = arith.constant 0 : i32
    %c0_i32_0 = arith.constant 0 : i32
    %c0_i32_1 = arith.constant 0 : i32
    return %c0_i32, %c0_i32_0 : i32, i32
  }
  func.func @transform_6(%arg0: i32) -> (i32, i32) {
    %c0_i32 = arith.constant 0 : i32
    %c0_i32_0 = arith.constant 0 : i32
    %c0_i32_1 = arith.constant 0 : i32
    return %c0_i32, %c0_i32_0 : i32, i32
  }
  func.func @transform_7(%arg0: i32) -> (i32, i32) {
    %c0_i32 = arith.constant 0 : i32
    %c0_i32_0 = arith.constant 0 : i32
    %c0_i32_1 = arith.constant 0 : i32
    return %c0_i32, %c0_i32_0 : i32, i32
  }
  func.func @transform_8(%arg0: i32) -> (i32, i32) {
    %c0_i32 = arith.constant 0 : i32
    %c0_i32_0 = arith.constant 0 : i32
    %c0_i32_1 = arith.constant 0 : i32
    return %c0_i32, %c0_i32_0 : i32, i32
  }
  func.func @transform_9(%arg0: i32) -> (i32, i32) {
    %c0_i32 = arith.constant 0 : i32
    %c0_i32_0 = arith.constant 0 : i32
    return %arg0, %c0_i32 : i32, i32
  }
}

</mosaic_0001>

<llo_original>
// kernel: tpu_custom_call.1
$region0: #{tpu_custom_call.1}
  #allocation0 [shape = 'u32[]', space=smem, size = 0x4, offset = 0x4, fixed_abs, tag = 'smem constant byte address 0x4 - core index']
  #allocation1 [shape = 'u32[144,128]{1,0:T(1,128)}', space=vmem, size = 0x12000, scoped, tag = 'internal scratch']
  %s0 = inlined_call_operand.hbm [shape: f32[2,32], index: 0, kind: input, shape index: {}]
  %s1 = inlined_call_operand.vmem [shape: f32[2,4], index: 1, kind: input, shape index: {}]
  %s2 = inlined_call_operand.hbm [shape: bf16[4,16], index: 2, kind: input, shape index: {}]
  %s3 = inlined_call_operand.hbm [shape: f32[1,16], index: 3, kind: input, shape index: {}]
  %s4 = inlined_call_operand.hbm [shape: bf16[32,32], index: 4, kind: input, shape index: {}]
  %s5 = inlined_call_operand.vmem [shape: bf16[16,32], index: 5, kind: input, shape index: {}]
  %s6 = inlined_call_operand.hbm [shape: f32[1,32], index: 6, kind: input, shape index: {}]
  %s7 = inlined_call_operand.vmem [shape: bf16[32,128], index: 7, kind: input, shape index: {}]
  %s8 = inlined_call_operand.vmem [shape: f32[1,128], index: 8, kind: input, shape index: {}]
  %s9 = inlined_call_operand.hbm [shape: f32[2,128], index: 9, kind: output, shape index: {}]
  %s10 = sld [smem:[#allocation0]]
  $region66: #{tpu_custom_call.1} parent=0
    _
  %s12 = ssub.s32 1, %s10
  %s13 = scalar_select 0, %s12, %s10
  $region1: #{tpu_custom_call.1} parent=0
    #allocation2 [shape = 'u8[8192]{0}', space=vmem, size = 0x2000, scoped, tag = 'input window, operand 0, single buffered']
    #allocation3 [shape = 's32[1]{0}', space=sflag, size = 0x4, scoped, tag = 'scoped memory for tpu_custom_call.1']
    #allocation4 [shape = 's32[1]{0}', space=sflag, size = 0x4, scoped, tag = 'scoped memory for tpu_custom_call.1']
    #allocation5 [shape = 'u8[1024]{0}', space=vmem, size = 0x400, scoped, tag = 'input window, operand 2, single buffered']
    #allocation6 [shape = 's32[1]{0}', space=sflag, size = 0x4, scoped, tag = 'scoped memory for tpu_custom_call.1']
    #allocation7 [shape = 'u8[512]{0}', space=vmem, size = 0x400, scoped, tag = 'input window, operand 3, single buffered']
    #allocation8 [shape = 'u8[8192]{0}', space=vmem, size = 0x2000, scoped, tag = 'input window, operand 4, single buffered']
    #allocation9 [shape = 's32[1]{0}', space=sflag, size = 0x4, scoped, tag = 'scoped memory for tpu_custom_call.1']
    #allocation10 [shape = 'u8[512]{0}', space=vmem, size = 0x400, scoped, tag = 'input window, operand 6, single buffered']
    #allocation11 [shape = 'u8[8192]{0}', space=vmem, size = 0x2000, scoped, tag = 'output window, operand 0, single buffered']
    %14 = vsyncpa [#allocation3], 0
    %15 = vsyncpa [#allocation6], 0
    %16 = vsyncpa [#allocation9], 0
    %17 = vsyncpa [#allocation4], 0
    // Predicated region
    $region2: #{tpu_custom_call.1} parent=1 // pred_check
      _
    $region3: #{tpu_custom_call.1} parent=1 // pred_check_branch
      %19 = sbr.rel (0) target = $region5
    $region4: #{tpu_custom_call.1} parent=1 // pred_region
      %s21 = ssub.s32 256, 32
      %22 = vsyncadd [#allocation3], %s21
      %s23 = sshll.u32 [#allocation2], 4
      %s24 = int_to_ptr.vmem [resolvable:$true] %s23
      %29 = dma.hbm_to_vmem [thread:$0]  %s0, 32, %s24, [#allocation3], 32, 32, 2
    $region5: #{tpu_custom_call.1} parent=1 // pred_fallthru
      _
    // Predicated region
    $region6: #{tpu_custom_call.1} parent=1 // pred_check
      _
    $region7: #{tpu_custom_call.1} parent=1 // pred_check_branch
      %31 = sbr.rel (0) target = $region9
    $region8: #{tpu_custom_call.1} parent=1 // pred_region
      _
    $region9: #{tpu_custom_call.1} parent=1 // pred_fallthru
      _
    // Predicated region
    $region10: #{tpu_custom_call.1} parent=1 // pred_check
      _
    $region11: #{tpu_custom_call.1} parent=1 // pred_check_branch
      %33 = sbr.rel (0) target = $region13
    $region12: #{tpu_custom_call.1} parent=1 // pred_region
      %s35 = ssub.s32 32, 32
      %36 = vsyncadd [#allocation6], %s35
      %s38 = sshll.u32 [#allocation5], 4
      %s39 = int_to_ptr.vmem [resolvable:$true] %s38
      %41 = dma.hbm_to_vmem [thread:$0]  %s2, 32, %s39, [#allocation6]
    $region13: #{tpu_custom_call.1} parent=1 // pred_fallthru
      _
    // Predicated region
    $region14: #{tpu_custom_call.1} parent=1 // pred_check
      _
    $region15: #{tpu_custom_call.1} parent=1 // pred_check_branch
      %43 = sbr.rel (0) target = $region17
    $region16: #{tpu_custom_call.1} parent=1 // pred_region
      %s45 = ssub.s32 16, 16
      %46 = vsyncadd [#allocation6], %s45
      %s48 = sshll.u32 [#allocation7], 4
      %s49 = int_to_ptr.vmem [resolvable:$true] %s48
      %51 = dma.hbm_to_vmem [thread:$0]  %s3, 16, %s49, [#allocation6]
    $region17: #{tpu_custom_call.1} parent=1 // pred_fallthru
      _
    // Predicated region
    $region18: #{tpu_custom_call.1} parent=1 // pred_check
      _
    $region19: #{tpu_custom_call.1} parent=1 // pred_check_branch
      %53 = sbr.rel (0) target = $region21
    $region20: #{tpu_custom_call.1} parent=1 // pred_region
      %s55 = ssub.s32 256, 256
      %56 = vsyncadd [#allocation9], %s55
      %s57 = sshll.u32 [#allocation8], 4
      %s58 = int_to_ptr.vmem [resolvable:$true] %s57
      %63 = dma.hbm_to_vmem [thread:$0]  %s4, 256, %s58, [#allocation9], 64, 64, 4
    $region21: #{tpu_custom_call.1} parent=1 // pred_fallthru
      _
    // Predicated region
    $region22: #{tpu_custom_call.1} parent=1 // pred_check
      _
    $region23: #{tpu_custom_call.1} parent=1 // pred_check_branch
      %65 = sbr.rel (0) target = $region25
    $region24: #{tpu_custom_call.1} parent=1 // pred_region
      _
    $region25: #{tpu_custom_call.1} parent=1 // pred_fallthru
      _
    // Predicated region
    $region26: #{tpu_custom_call.1} parent=1 // pred_check
      _
    $region27: #{tpu_custom_call.1} parent=1 // pred_check_branch
      %67 = sbr.rel (0) target = $region29
    $region28: #{tpu_custom_call.1} parent=1 // pred_region
      %s69 = ssub.s32 16, 16
      %70 = vsyncadd [#allocation9], %s69
      %s72 = sshll.u32 [#allocation10], 4
      %s73 = int_to_ptr.vmem [resolvable:$true] %s72
      %75 = dma.hbm_to_vmem [thread:$0]  %s6, 16, %s73, [#allocation9]
    $region29: #{tpu_custom_call.1} parent=1 // pred_fallthru
      _
    // Predicated region
    $region30: #{tpu_custom_call.1} parent=1 // pred_check
      _
    $region31: #{tpu_custom_call.1} parent=1 // pred_check_branch
      %77 = sbr.rel (0) target = $region33
    $region32: #{tpu_custom_call.1} parent=1 // pred_region
      _
    $region33: #{tpu_custom_call.1} parent=1 // pred_fallthru
      _
    // Predicated region
    $region34: #{tpu_custom_call.1} parent=1 // pred_check
      _
    $region35: #{tpu_custom_call.1} parent=1 // pred_check_branch
      %79 = sbr.rel (0) target = $region37
    $region36: #{tpu_custom_call.1} parent=1 // pred_region
      _
    $region37: #{tpu_custom_call.1} parent=1 // pred_fallthru
      _
    // Predicated region
    $region38: #{tpu_custom_call.1} parent=1 // pred_check
      _
    $region39: #{tpu_custom_call.1} parent=1 // pred_check_branch
      %81 = sbr.rel (0) target = $region41
    $region40: #{tpu_custom_call.1} parent=1 // pred_region
      %82 = dma.done [#allocation3], 256
    $region41: #{tpu_custom_call.1} parent=1 // pred_fallthru
      _
    // Predicated region
    $region42: #{tpu_custom_call.1} parent=1 // pred_check
      _
    $region43: #{tpu_custom_call.1} parent=1 // pred_check_branch
      %84 = sbr.rel (0) target = $region45
    $region44: #{tpu_custom_call.1} parent=1 // pred_region
      %85 = dma.done [#allocation6], 32
    $region45: #{tpu_custom_call.1} parent=1 // pred_fallthru
      _
    // Predicated region
    $region46: #{tpu_custom_call.1} parent=1 // pred_check
      _
    $region47: #{tpu_custom_call.1} parent=1 // pred_check_branch
      %87 = sbr.rel (0) target = $region49
    $region48: #{tpu_custom_call.1} parent=1 // pred_region
      %88 = dma.done [#allocation6], 16
    $region49: #{tpu_custom_call.1} parent=1 // pred_fallthru
      _
    // Predicated region
    $region50: #{tpu_custom_call.1} parent=1 // pred_check
      _
    $region51: #{tpu_custom_call.1} parent=1 // pred_check_branch
      %90 = sbr.rel (0) target = $region53
    $region52: #{tpu_custom_call.1} parent=1 // pred_region
      %91 = dma.done [#allocation9], 256
    $region53: #{tpu_custom_call.1} parent=1 // pred_fallthru
      _
    // Predicated region
    $region54: #{tpu_custom_call.1} parent=1 // pred_check
      _
    $region55: #{tpu_custom_call.1} parent=1 // pred_check_branch
      %93 = sbr.rel (0) target = $region57
    $region56: #{tpu_custom_call.1} parent=1 // pred_region
      %94 = dma.done [#allocation9], 16
    $region57: #{tpu_custom_call.1} parent=1 // pred_fallthru
      _
    %v96 = vld [vmem:[%s1] sm:$0xff]
    %v97 = vld [vmem:[%s1 + $0x8] sm:$0xff]
    %v98 = vpack.c.bf16 %v97, %v96
    %v99 = vld [vmem:[#allocation5] sm:$0x3]
    %v100 = vld [vmem:[#allocation7] sm:$0x1]
    %v102 = vlaneseq
    %v103 = vshrl.u32 %v102, 7
    %v104 = vsub.s32 0, %v103
    %v105 = vrot.slane %v100, %v104
    %vm107 = vcmask 31744
    %v109 = vsel %vm107, %v98, 0
    %vm111 = vcmask 1041408
    %v113 = vsel %vm111, %v99, 0
    %115 = vmatprep.subr.bf16.mxu0 0
    %116 = vmatpush1.bf16.msra.mxu0 %v113
    %117 = vmatprep.subr.bf16.mxu0 0
    %118 = vmatpush1.bf16.msra.mxu0 0
    %119 = vmatprep.subr.bf16.mxu0 0
    %120 = vmatpush1.bf16.msra.mxu0 0
    %121 = vmatprep.subr.bf16.mxu0 0
    %122 = vmatpush1.bf16.msra.mxu0 0
    %123 = vmatprep.subr.bf16.mxu0 0
    %124 = vmatpush1.bf16.msra.mxu0 0
    %125 = vmatprep.subr.bf16.mxu0 0
    %126 = vmatpush1.bf16.msra.mxu0 0
    %127 = vmatprep.subr.bf16.mxu0 0
    %128 = vmatpush1.bf16.msra.mxu0 0
    %129 = vmatprep.subr.bf16.mxu0 0
    %130 = vmatpush1.bf16.msra.mxu0 0
    %131 = vmatprep.subr.bf16.mxu0 0
    %132 = vmatpush1.bf16.msra.mxu0 0
    %133 = vmatprep.subr.bf16.mxu0 0
    %134 = vmatpush1.bf16.msra.mxu0 0
    %135 = vmatprep.subr.bf16.mxu0 0
    %136 = vmatpush1.bf16.msra.mxu0 0
    %137 = vmatprep.subr.bf16.mxu0 0
    %138 = vmatpush1.bf16.msra.mxu0 0
    %139 = vmatprep.subr.bf16.mxu0 0
    %140 = vmatpush1.bf16.msra.mxu0 0
    %141 = vmatprep.subr.bf16.mxu0 0
    %142 = vmatpush1.bf16.msra.mxu0 0
    %143 = vmatprep.subr.bf16.mxu0 0
    %144 = vmatpush1.bf16.msra.mxu0 0
    %145 = vmatprep.subr.bf16.mxu0 0
    %146 = vmatpush1.bf16.msra.mxu0 0
    %147 = vmatprep.mubr.bf16.mxu0 0
    %148 = vmatmul.mubr.bf16.gmra.mrb[0].mxu0 %v109
    %v149 = vpop.f32.mrb[0].mxu0
    %v150 = vadd.f32 %v105, %v149
    %v151 = vpop.f32.mrb[0].mxu0
    %v152 = vpop.f32.mrb[0].mxu0
    %v153 = vadd.f32 %v105, %v152
    %v154 = vpop.f32.mrb[0].mxu0
    %155 = vdwg.mxu0
    %v156 = vpack.c.bf16 %v153, %v150
    %v157 = vtanh.bf16.pop %v156
    %v158 = vld [vmem:[#allocation2] sm:$0xff]
    %v159 = vld [vmem:[#allocation2 + $0x8] sm:$0xff]
    %v160 = vpack.c.bf16 %v159, %v158
    %v161 = vld [vmem:[#allocation8] sm:$0xf]
    %v162 = vld [vmem:[#allocation8 + $0x4] sm:$0xf]
    %v163 = vld [vmem:[#allocation8 + $0x8] sm:$0xf]
    %v164 = vld [vmem:[#allocation8 + $0xc] sm:$0xf]
    %v165 = vld [vmem:[%s5] sm:$0xf]
    %v166 = vld [vmem:[%s5 + $0x4] sm:$0xf]
    %v169 = vunpack.c.l.b16 %v165
    %v170 = vunpack.c.l.b16 %v166
    %v171 = vpack.c.b16 %v170, %v169
    %vm173 = vcmask 130048
    %v175 = vsel %vm173, %v157, 0
    %177 = vmatprep.subr.bf16.mxu0 0
    %178 = vmatpush1.bf16.msra.mxu0 %v171
    %179 = vmatprep.subr.bf16.mxu0 0
    %180 = vmatpush1.bf16.msra.mxu0 0
    %181 = vmatprep.subr.bf16.mxu0 0
    %182 = vmatpush1.bf16.msra.mxu0 0
    %183 = vmatprep.subr.bf16.mxu0 0
    %184 = vmatpush1.bf16.msra.mxu0 0
    %185 = vmatprep.subr.bf16.mxu0 0
    %186 = vmatpush1.bf16.msra.mxu0 0
    %187 = vmatprep.subr.bf16.mxu0 0
    %188 = vmatpush1.bf16.msra.mxu0 0
    %189 = vmatprep.subr.bf16.mxu0 0
    %190 = vmatpush1.bf16.msra.mxu0 0
    %191 = vmatprep.subr.bf16.mxu0 0
    %192 = vmatpush1.bf16.msra.mxu0 0
    %193 = vmatprep.subr.bf16.mxu0 0
    %194 = vmatpush1.bf16.msra.mxu0 0
    %195 = vmatprep.subr.bf16.mxu0 0
    %196 = vmatpush1.bf16.msra.mxu0 0
    %197 = vmatprep.subr.bf16.mxu0 0
    %198 = vmatpush1.bf16.msra.mxu0 0
    %199 = vmatprep.subr.bf16.mxu0 0
    %200 = vmatpush1.bf16.msra.mxu0 0
    %201 = vmatprep.subr.bf16.mxu0 0
    %202 = vmatpush1.bf16.msra.mxu0 0
    %203 = vmatprep.subr.bf16.mxu0 0
    %204 = vmatpush1.bf16.msra.mxu0 0
    %205 = vmatprep.subr.bf16.mxu0 0
    %206 = vmatpush1.bf16.msra.mxu0 0
    %207 = vmatprep.subr.bf16.mxu0 0
    %208 = vmatpush1.bf16.msra.mxu0 0
    %209 = vmatprep.mubr.bf16.mxu0 0
    %210 = vmatmul.mubr.bf16.gmra.mrb[0].mxu0 %v175
    %v211 = vpop.f32.mrb[0].mxu0
    %v212 = vadd.f32 0.0, %v211
    %v213 = vpop.f32.mrb[0].mxu0
    %v214 = vpop.f32.mrb[0].mxu0
    %v215 = vadd.f32 0.0, %v214
    %v216 = vpop.f32.mrb[0].mxu0
    %217 = vdwg.mxu0
    %v222 = vunpack.c.l.b16 %v161
    %v223 = vunpack.c.l.b16 %v162
    %v224 = vunpack.c.l.b16 %v163
    %v225 = vunpack.c.l.b16 %v164
    %v226 = vpack.c.b16 %v223, %v222
    %v227 = vpack.c.b16 %v225, %v224
    %vm230 = vcmask 261120
    %v232 = vsel %vm230, %v160, 0
    %234 = vmatprep.subr.bf16.mxu0 0
    %235 = vmatpush1.bf16.msra.mxu0 %v226
    %236 = vmatprep.subr.bf16.mxu0 0
    %237 = vmatpush1.bf16.msra.mxu0 %v227
    %238 = vmatprep.subr.bf16.mxu0 0
    %239 = vmatpush1.bf16.msra.mxu0 0
    %240 = vmatprep.subr.bf16.mxu0 0
    %241 = vmatpush1.bf16.msra.mxu0 0
    %242 = vmatprep.subr.bf16.mxu0 0
    %243 = vmatpush1.bf16.msra.mxu0 0
    %244 = vmatprep.subr.bf16.mxu0 0
    %245 = vmatpush1.bf16.msra.mxu0 0
    %246 = vmatprep.subr.bf16.mxu0 0
    %247 = vmatpush1.bf16.msra.mxu0 0
    %248 = vmatprep.subr.bf16.mxu0 0
    %249 = vmatpush1.bf16.msra.mxu0 0
    %250 = vmatprep.subr.bf16.mxu0 0
    %251 = vmatpush1.bf16.msra.mxu0 0
    %252 = vmatprep.subr.bf16.mxu0 0
    %253 = vmatpush1.bf16.msra.mxu0 0
    %254 = vmatprep.subr.bf16.mxu0 0
    %255 = vmatpush1.bf16.msra.mxu0 0
    %256 = vmatprep.subr.bf16.mxu0 0
    %257 = vmatpush1.bf16.msra.mxu0 0
    %258 = vmatprep.subr.bf16.mxu0 0
    %259 = vmatpush1.bf16.msra.mxu0 0
    %260 = vmatprep.subr.bf16.mxu0 0
    %261 = vmatpush1.bf16.msra.mxu0 0
    %262 = vmatprep.subr.bf16.mxu0 0
    %263 = vmatpush1.bf16.msra.mxu0 0
    %264 = vmatprep.subr.bf16.mxu0 0
    %265 = vmatpush1.bf16.msra.mxu0 0
    %266 = vmatprep.mubr.bf16.mxu0 0
    %267 = vmatmul.mubr.bf16.gmra.mrb[0].mxu0 %v232
    %v268 = vpop.f32.mrb[0].mxu0
    %v269 = vadd.f32 %v212, %v268
    %v270 = vpop.f32.mrb[0].mxu0
    %v271 = vpop.f32.mrb[0].mxu0
    %v272 = vadd.f32 %v215, %v271
    %v273 = vpop.f32.mrb[0].mxu0
    %274 = vdwg.mxu0
    %v275 = vld [vmem:[#allocation10] sm:$0x1]
    %v277 = vlaneseq
    %v278 = vshrl.u32 %v277, 7
    %v279 = vsub.s32 0, %v278
    %v280 = vrot.slane %v275, %v279
    %v282 = vadd.f32 %v269, %v280
    %v283 = vadd.f32 %v272, %v280
    %v284 = vpack.c.bf16 %v283, %v282
    %v285 = vtanh.bf16.pop %v284
    %v286 = vld [vmem:[%s7] sm:$0xf]
    %v287 = vld [vmem:[%s7 + $0x4] sm:$0xf]
    %v288 = vld [vmem:[%s7 + $0x8] sm:$0xf]
    %v289 = vld [vmem:[%s7 + $0xc] sm:$0xf]
    %v290 = vld [vmem:[%s8] sm:$0x1]
    %v292 = vlaneseq
    %v293 = vshrl.u32 %v292, 7
    %v294 = vsub.s32 0, %v293
    %v295 = vrot.slane %v290, %v294
    %v301 = vunpack.c.l.b16 %v286
    %v302 = vunpack.c.l.b16 %v287
    %v303 = vunpack.c.l.b16 %v288
    %v304 = vunpack.c.l.b16 %v289
    %v305 = vpack.c.b16 %v302, %v301
    %v306 = vpack.c.b16 %v304, %v303
    %v310 = vsel %vm230, %v285, 0
    %312 = vmatprep.subr.bf16.mxu0 0
    %313 = vmatpush1.bf16.msra.mxu0 %v305
    %314 = vmatprep.subr.bf16.mxu0 0
    %315 = vmatpush1.bf16.msra.mxu0 %v306
    %316 = vmatprep.subr.bf16.mxu0 0
    %317 = vmatpush1.bf16.msra.mxu0 0
    %318 = vmatprep.subr.bf16.mxu0 0
    %319 = vmatpush1.bf16.msra.mxu0 0
    %320 = vmatprep.subr.bf16.mxu0 0
    %321 = vmatpush1.bf16.msra.mxu0 0
    %322 = vmatprep.subr.bf16.mxu0 0
    %323 = vmatpush1.bf16.msra.mxu0 0
    %324 = vmatprep.subr.bf16.mxu0 0
    %325 = vmatpush1.bf16.msra.mxu0 0
    %326 = vmatprep.subr.bf16.mxu0 0
    %327 = vmatpush1.bf16.msra.mxu0 0
    %328 = vmatprep.subr.bf16.mxu0 0
    %329 = vmatpush1.bf16.msra.mxu0 0
    %330 = vmatprep.subr.bf16.mxu0 0
    %331 = vmatpush1.bf16.msra.mxu0 0
    %332 = vmatprep.subr.bf16.mxu0 0
    %333 = vmatpush1.bf16.msra.mxu0 0
    %334 = vmatprep.subr.bf16.mxu0 0
    %335 = vmatpush1.bf16.msra.mxu0 0
    %336 = vmatprep.subr.bf16.mxu0 0
    %337 = vmatpush1.bf16.msra.mxu0 0
    %338 = vmatprep.subr.bf16.mxu0 0
    %339 = vmatpush1.bf16.msra.mxu0 0
    %340 = vmatprep.subr.bf16.mxu0 0
    %341 = vmatpush1.bf16.msra.mxu0 0
    %342 = vmatprep.subr.bf16.mxu0 0
    %343 = vmatpush1.bf16.msra.mxu0 0
    %344 = vmatprep.mubr.bf16.mxu0 0
    %345 = vmatmul.mubr.bf16.gmra.mrb[0].mxu0 %v310
    %v346 = vpop.f32.mrb[0].mxu0
    %v347 = vadd.f32 %v295, %v346
    %v348 = vpop.f32.mrb[0].mxu0
    %v349 = vpop.f32.mrb[0].mxu0
    %v350 = vadd.f32 %v295, %v349
    %v351 = vpop.f32.mrb[0].mxu0
    %352 = vdwg.mxu0
    %353 = vst [vmem:[#allocation11] sm:$0xff] %v347
    %354 = vst [vmem:[#allocation11 + $0x8] sm:$0xff] %v350
    // Predicated region
    $region58: #{tpu_custom_call.1} parent=1 // pred_check
      _
    $region59: #{tpu_custom_call.1} parent=1 // pred_check_branch
      %356 = sbr.rel (0) target = $region61
    $region60: #{tpu_custom_call.1} parent=1 // pred_region
      %s358 = ssub.s32 256, 32
      %359 = vsyncadd [#allocation4], %s358
      %s360 = sshll.u32 [#allocation11], 4
      %s361 = int_to_ptr.vmem [resolvable:$true] %s360
      %366 = dma.vmem_to_hbm [thread:$0]  %s361, 32, %s9, [#allocation4], 32, 32, 2
    $region61: #{tpu_custom_call.1} parent=1 // pred_fallthru
      _
    // Predicated region
    $region62: #{tpu_custom_call.1} parent=1 // pred_check
      _
    $region63: #{tpu_custom_call.1} parent=1 // pred_check_branch
      %368 = sbr.rel (0) target = $region65
    $region64: #{tpu_custom_call.1} parent=1 // pred_region
      %369 = dma.done [#allocation4], 256
    $region65: #{tpu_custom_call.1} parent=1 // pred_fallthru
      _
    %370 = vsyncpa [#allocation3], 1
    %371 = vsyncpa [#allocation6], 1
    %372 = vsyncpa [#allocation9], 1
    %373 = vsyncpa [#allocation4], 1

</llo_original>
